<compile_context>
chip_gen: v6e
topology: v6e:2x2x1
jax: 0.10.0
libtpu: 0.0.40
codegen_flags: <defaults>
</compile_context>

<pallas_src>
import jax
import jax.numpy as jnp
from jax.experimental import pallas as pl
from jax.experimental.pallas import tpu as pltpu


def _round_up(n, m):
    return ((n + m - 1) // m) * m


def _mlp_kernel(x_ref, w1_ref, b1_ref, w2_ref, b2_ref, o_ref):
    # fc1: bf16 x bf16 -> f32 accumulation on the MXU.
    x = x_ref[...].astype(jnp.bfloat16)
    h = jnp.dot(x, w1_ref[...], preferred_element_type=jnp.float32)
    # bias + ReLU in f32 on the VPU, downcast activations to bf16 for fc2.
    h = jnp.maximum(h + b1_ref[...], 0.0).astype(jnp.bfloat16)
    # fc2: (tb, Hp) @ (Hp, 2) -> (tb, 2) f32.  N=2 is padded internally by the
    # MXU (it has slack); the narrow store costs the same vst count as a
    # lane-padded one but 64x less HBM writeback.
    out = jnp.dot(h, w2_ref[...], preferred_element_type=jnp.float32)
    o_ref[...] = (out + b2_ref[...]).astype(o_ref.dtype)


def prepare_params(w1, b1, w2, b2):
    """One-time packing of fc1/fc2 params for the kernel (hoisted out of the
    per-call path).  Pads the hidden dim to a multiple of 128 with zeros
    (padded hidden units contribute exactly 0) and casts weights to bf16."""
    D, H = w1.shape
    O = w2.shape[1]
    Hp = _round_up(H, 128)
    w1p = w1.astype(jnp.bfloat16)
    b1p = jnp.reshape(b1, (1, H)).astype(jnp.float32)
    w2p = w2.astype(jnp.bfloat16)
    if Hp != H:
        w1p = jnp.pad(w1p, ((0, 0), (0, Hp - H)))
        b1p = jnp.pad(b1p, ((0, 0), (0, Hp - H)))
        w2p = jnp.pad(w2p, ((0, Hp - H), (0, 0)))
    b2p = jnp.reshape(b2, (1, O)).astype(jnp.float32)
    return w1p, b1p, w2p, b2p


def _pick_block_b(B, cap=1024):
    """Batch tile: aim for >= 2 grid steps (v7x megacore + DMA pipelining),
    256-granule when large (full 256-wide MXU passes on v6e/v7x), cap so the
    f32 hidden intermediate stays small in VMEM."""
    B8 = _round_up(B, 8)
    if B8 <= 64:
        return B8                      # too small to split usefully
    half = -(-B // 2)
    granule = 256 if half >= 256 else 8
    bb = _round_up(half, granule)
    return max(8, min(cap, bb, _round_up(B, granule)))


def classifier_net_forward(x, params, *, block_b=None):
    """Fused MLP forward: relu(x @ w1 + b1) @ w2 + b2.

    x: (B, D) float32; params: output of prepare_params(). Returns (B, 2) f32.
    """
    w1p, b1p, w2p, b2p = params
    B, D = x.shape
    Dw, Hp = w1p.shape
    O = w2p.shape[1]
    assert Dw == D, f"input dim mismatch: x has {D}, w1 has {Dw}"

    if block_b is None:
        block_b = _pick_block_b(B)
    block_b = max(8, _round_up(min(block_b, _round_up(B, 8)), 8))
    num_steps = pl.cdiv(B, block_b)

    # Extra buffering on the streamed x tile once the grid actually iterates.
    if num_steps >= 2:
        x_spec = pl.BlockSpec((block_b, D), lambda i: (i, 0),
                              pipeline_mode=pl.Buffered(3))
    else:
        x_spec = pl.BlockSpec((block_b, D), lambda i: (i, 0))

    # VMEM budget from actual tile bytes (x tile 3-deep, weights/out 2-deep,
    # f32 hidden intermediate + slack), clamped to [32, 48] MiB.
    x_bytes = 3 * block_b * D * x.dtype.itemsize
    w_bytes = 2 * (w1p.size * 2 + b1p.size * 4 + w2p.size * 2 + b2p.size * 4)
    out_bytes = 2 * block_b * O * 4
    h_bytes = 2 * block_b * Hp * 4
    vmem_limit = int(min(48 << 20,
                         max(32 << 20,
                             2 * (x_bytes + w_bytes + out_bytes + h_bytes))))

    out = pl.pallas_call(
        _mlp_kernel,
        out_shape=jax.ShapeDtypeStruct((B, O), jnp.float32),
        grid_spec=pltpu.PrefetchScalarGridSpec(
            num_scalar_prefetch=0,
            grid=(num_steps,),
            in_specs=[
                x_spec,                                    # x tile (streamed)
                pl.BlockSpec((D, Hp), lambda i: (0, 0)),   # w1 (VMEM-resident)
                pl.BlockSpec((1, Hp), lambda i: (0, 0)),   # b1
                pl.BlockSpec((Hp, O), lambda i: (0, 0)),   # w2 (VMEM-resident)
                pl.BlockSpec((1, O), lambda i: (0, 0)),    # b2
            ],
            out_specs=pl.BlockSpec((block_b, O), lambda i: (i, 0)),
        ),
        compiler_params=pltpu.CompilerParams(
            dimension_semantics=("parallel",),
            vmem_limit_bytes=vmem_limit,
        ),
    )(x, w1p, b1p, w2p, b2p)
    return out


def init_params(key, input_dim, hidden_dim, out_dim=2):
    """Deterministic init mimicking nn.Linear default (U[-1/sqrt(fan_in), ...]).
    Weights stored as (in, out) so the kernel computes x @ W + b."""
    k1, k2, k3, k4 = jax.random.split(key, 4)
    lim1 = 1.0 / jnp.sqrt(jnp.float32(input_dim))
    lim2 = 1.0 / jnp.sqrt(jnp.float32(hidden_dim))
    w1 = jax.random.uniform(k1, (input_dim, hidden_dim), jnp.float32, -lim1, lim1)
    b1 = jax.random.uniform(k2, (1, hidden_dim), jnp.float32, -lim1, lim1)
    w2 = jax.random.uniform(k3, (hidden_dim, out_dim), jnp.float32, -lim2, lim2)
    b2 = jax.random.uniform(k4, (1, out_dim), jnp.float32, -lim2, lim2)
    return w1, b1, w2, b2


def _ref_forward(x, w1, b1, w2, b2):
    """Plain-JAX reference with the same bf16-input / f32-accumulate recipe."""
    h = jnp.dot(x.astype(jnp.bfloat16), w1.astype(jnp.bfloat16),
                preferred_element_type=jnp.float32) + jnp.reshape(b1, (1, -1))
    h = jnp.maximum(h, 0.0)
    return jnp.dot(h.astype(jnp.bfloat16), w2.astype(jnp.bfloat16),
                   preferred_element_type=jnp.float32) + jnp.reshape(b2, (1, -1))


if __name__ == "__main__":
    key = jax.random.PRNGKey(0)

    # --- Test 1: module defaults at small shape (batch=8, in=32, hidden=512) ---
    B, input_dim, hidden_dim = 8, 32, 512
    kx, kp, key = jax.random.split(key, 3)
    x = jax.random.normal(kx, (B, input_dim), jnp.float32)
    w1, b1, w2, b2 = init_params(kp, input_dim, hidden_dim)
    params = prepare_params(w1, b1, w2, b2)

    out = jax.block_until_ready(classifier_net_forward(x, params))
    ref = _ref_forward(x, w1, b1, w2, b2)
    ref_f32 = jnp.maximum(x @ w1 + b1, 0.0) @ w2 + b2
    assert out.shape == (B, 2)
    assert jnp.allclose(out, ref, atol=2e-3, rtol=2e-3), "bf16-matched ref mismatch"
    assert jnp.allclose(out, ref_f32, atol=0.15, rtol=0.05), "f32 semantic drift"

    # --- Test 2: ragged batch + odd feature dims, auto 2-step parallel grid ---
    B2, in2, hid2 = 300, 48, 96
    kx2, kp2 = jax.random.split(key)
    x2 = jax.random.normal(kx2, (B2, in2), jnp.float32)
    raw2 = init_params(kp2, in2, hid2)
    p2 = prepare_params(*raw2)
    out2 = jax.block_until_ready(classifier_net_forward(x2, p2))
    ref2 = _ref_forward(x2, *raw2)
    assert out2.shape == (B2, 2)
    assert jnp.allclose(out2, ref2, atol=2e-3, rtol=2e-3), "tiled/ragged path mismatch"

    print("KERNEL_OK")
</pallas_src>

<mosaic_0001>
module attributes {stable_mosaic.version = 11 : i64} {
  func.func @_mlp_kernel(%arg0: i32, %arg1: memref<8x32xf32, #tpu.memory_space<vmem>>, %arg2: memref<32x512xbf16, #tpu.memory_space<vmem>>, %arg3: memref<1x512xf32, #tpu.memory_space<vmem>>, %arg4: memref<512x2xbf16, #tpu.memory_space<vmem>>, %arg5: memref<1x2xf32, #tpu.memory_space<vmem>>, %arg6: memref<8x2xf32, #tpu.memory_space<vmem>>) attributes {dimension_semantics = [#tpu.dimension_semantics<parallel>], iteration_bounds = array<i64: 1>, scalar_prefetch = 0 : i64, scratch_operands = 0 : i64, tpu.core_type = #tpu.core_type<tc>, window_params = [{transform_indices = @transform_0, window_bounds = array<i64: 8, 32>}, {pipeline_mode = #tpu.pipeline_mode<synchronous>, transform_indices = @transform_1, window_bounds = array<i64: 32, 512>}, {pipeline_mode = #tpu.pipeline_mode<synchronous>, transform_indices = @transform_2, window_bounds = array<i64: 1, 512>}, {pipeline_mode = #tpu.pipeline_mode<synchronous>, transform_indices = @transform_3, window_bounds = array<i64: 512, 2>}, {pipeline_mode = #tpu.pipeline_mode<synchronous>, transform_indices = @transform_4, window_bounds = array<i64: 1, 2>}, {transform_indices = @transform_5, window_bounds = array<i64: 8, 2>}]} {
    %c0 = arith.constant 0 : index
    %c0_0 = arith.constant 0 : index
    %0 = vector.load %arg1[%c0, %c0_0] : memref<8x32xf32, #tpu.memory_space<vmem>>, vector<8x32xf32>
    %1 = arith.truncf %0 : vector<8x32xf32> to vector<8x32xbf16>
    %c0_1 = arith.constant 0 : index
    %c0_2 = arith.constant 0 : index
    %2 = vector.load %arg2[%c0_1, %c0_2] : memref<32x512xbf16, #tpu.memory_space<vmem>>, vector<32x512xbf16>
    %cst = arith.constant dense<0.000000e+00> : vector<8x512xf32>
    %3 = tpu.matmul %1, %2, %cst {dimension_numbers = #tpu.dot_dimension_numbers<[1], [0], [0], [1], [0, 0, 1, 1], [], []>} : vector<8x32xbf16>, vector<32x512xbf16>, vector<8x512xf32> -> vector<8x512xf32>
    %c0_3 = arith.constant 0 : index
    %c0_4 = arith.constant 0 : index
    %4 = vector.load %arg3[%c0_3, %c0_4] : memref<1x512xf32, #tpu.memory_space<vmem>>, vector<1x512xf32>
    %5 = vector.broadcast %4 : vector<1x512xf32> to vector<8x512xf32>
    %6 = arith.addf %3, %5 : vector<8x512xf32>
    %cst_5 = arith.constant 0.000000e+00 : f32
    %7 = vector.broadcast %cst_5 : f32 to vector<8x512xf32>
    %8 = arith.maximumf %6, %7 : vector<8x512xf32>
    %9 = arith.truncf %8 : vector<8x512xf32> to vector<8x512xbf16>
    %c0_6 = arith.constant 0 : index
    %c0_7 = arith.constant 0 : index
    %10 = vector.load %arg4[%c0_6, %c0_7] : memref<512x2xbf16, #tpu.memory_space<vmem>>, vector<512x2xbf16>
    %cst_8 = arith.constant dense<0.000000e+00> : vector<8x2xf32>
    %11 = tpu.matmul %9, %10, %cst_8 {dimension_numbers = #tpu.dot_dimension_numbers<[1], [0], [0], [1], [0, 0, 1, 1], [], []>} : vector<8x512xbf16>, vector<512x2xbf16>, vector<8x2xf32> -> vector<8x2xf32>
    %c0_9 = arith.constant 0 : index
    %c0_10 = arith.constant 0 : index
    %12 = vector.load %arg5[%c0_9, %c0_10] : memref<1x2xf32, #tpu.memory_space<vmem>>, vector<1x2xf32>
    %13 = vector.broadcast %12 : vector<1x2xf32> to vector<8x2xf32>
    %14 = arith.addf %11, %13 : vector<8x2xf32>
    %c0_11 = arith.constant 0 : index
    %c0_12 = arith.constant 0 : index
    %15 = vector.load %arg6[%c0_11, %c0_12] : memref<8x2xf32, #tpu.memory_space<vmem>>, vector<8x2xf32>
    tpu.vector_store %arg6[%c0_11, %c0_12], %14 {strides = array<i32>} : memref<8x2xf32, #tpu.memory_space<vmem>>, vector<8x2xf32>,
    return
  }
  func.func @transform_0(%arg0: i32) -> (i32, i32) {
    %c0_i32 = arith.constant 0 : i32
    %c0_i32_0 = arith.constant 0 : i32
    return %arg0, %c0_i32 : i32, i32
  }
  func.func @transform_1(%arg0: i32) -> (i32, i32) {
    %c0_i32 = arith.constant 0 : i32
    %c0_i32_0 = arith.constant 0 : i32
    %c0_i32_1 = arith.constant 0 : i32
    return %c0_i32, %c0_i32_0 : i32, i32
  }
  func.func @transform_2(%arg0: i32) -> (i32, i32) {
    %c0_i32 = arith.constant 0 : i32
    %c0_i32_0 = arith.constant 0 : i32
    %c0_i32_1 = arith.constant 0 : i32
    return %c0_i32, %c0_i32_0 : i32, i32
  }
  func.func @transform_3(%arg0: i32) -> (i32, i32) {
    %c0_i32 = arith.constant 0 : i32
    %c0_i32_0 = arith.constant 0 : i32
    %c0_i32_1 = arith.constant 0 : i32
    return %c0_i32, %c0_i32_0 : i32, i32
  }
  func.func @transform_4(%arg0: i32) -> (i32, i32) {
    %c0_i32 = arith.constant 0 : i32
    %c0_i32_0 = arith.constant 0 : i32
    %c0_i32_1 = arith.constant 0 : i32
    return %c0_i32, %c0_i32_0 : i32, i32
  }
  func.func @transform_5(%arg0: i32) -> (i32, i32) {
    %c0_i32 = arith.constant 0 : i32
    %c0_i32_0 = arith.constant 0 : i32
    return %arg0, %c0_i32 : i32, i32
  }
}

</mosaic_0001>

<llo_original>
// kernel: tpu_custom_call.1
$region0: #{tpu_custom_call.1}
  #allocation0 [shape = 'u32[]', space=smem, size = 0x4, offset = 0x4, fixed_abs, tag = 'smem constant byte address 0x4 - core index']
  #allocation1 [shape = 'u32[144,128]{1,0:T(1,128)}', space=vmem, size = 0x12000, scoped, tag = 'internal scratch']
  %s0 = inlined_call_operand.vmem [shape: f32[8,32], index: 0, kind: input, shape index: {}]
  %s1 = inlined_call_operand.vmem [shape: bf16[32,512], index: 1, kind: input, shape index: {}]
  %s2 = inlined_call_operand.vmem [shape: f32[1,512], index: 2, kind: input, shape index: {}]
  %s3 = inlined_call_operand.vmem [shape: bf16[512,2], index: 3, kind: input, shape index: {}]
  %s4 = inlined_call_operand.vmem [shape: f32[1,2], index: 4, kind: input, shape index: {}]
  %s5 = inlined_call_operand.vmem [shape: f32[8,2], index: 5, kind: output, shape index: {}]
  %s6 = sld [smem:[#allocation0]]
  $region30: #{tpu_custom_call.1} parent=0
    _
  %s8 = ssub.s32 1, %s6
  %s9 = scalar_select 0, %s8, %s6
  // Predicated region
  $region2: #{tpu_custom_call.1} parent=0 // pred_check
    _
  $region3: #{tpu_custom_call.1} parent=0 // pred_check_branch
    %11 = sbr.rel (0) target = $region5
  $region4: #{tpu_custom_call.1} parent=0 // pred_region
    _
  $region5: #{tpu_custom_call.1} parent=0 // pred_fallthru
    _
  // Predicated region
  $region6: #{tpu_custom_call.1} parent=0 // pred_check
    _
  $region7: #{tpu_custom_call.1} parent=0 // pred_check_branch
    %13 = sbr.rel (0) target = $region9
  $region8: #{tpu_custom_call.1} parent=0 // pred_region
    _
  $region9: #{tpu_custom_call.1} parent=0 // pred_fallthru
    _
  // Predicated region
  $region10: #{tpu_custom_call.1} parent=0 // pred_check
    _
  $region11: #{tpu_custom_call.1} parent=0 // pred_check_branch
    %15 = sbr.rel (0) target = $region13
  $region12: #{tpu_custom_call.1} parent=0 // pred_region
    _
  $region13: #{tpu_custom_call.1} parent=0 // pred_fallthru
    _
  // Predicated region
  $region14: #{tpu_custom_call.1} parent=0 // pred_check
    _
  $region15: #{tpu_custom_call.1} parent=0 // pred_check_branch
    %17 = sbr.rel (0) target = $region17
  $region16: #{tpu_custom_call.1} parent=0 // pred_region
    _
  $region17: #{tpu_custom_call.1} parent=0 // pred_fallthru
    _
  // Predicated region
  $region18: #{tpu_custom_call.1} parent=0 // pred_check
    _
  $region19: #{tpu_custom_call.1} parent=0 // pred_check_branch
    %19 = sbr.rel (0) target = $region21
  $region20: #{tpu_custom_call.1} parent=0 // pred_region
    _
  $region21: #{tpu_custom_call.1} parent=0 // pred_fallthru
    _
  %v21 = vld [vmem:[%s0] sm:$0xff]
  %v22 = vpack.c.bf16 %v21, %v21
  %v23 = vld [vmem:[%s1] sm:$0xff]
  %v24 = vld [vmem:[%s1 + $0x8] sm:$0xff]
  %v25 = vld [vmem:[%s1 + $0x10] sm:$0xff]
  %v26 = vld [vmem:[%s1 + $0x18] sm:$0xff]
  %v27 = vld [vmem:[%s1 + $0x20] sm:$0xff]
  %v28 = vld [vmem:[%s1 + $0x28] sm:$0xff]
  %v29 = vld [vmem:[%s1 + $0x30] sm:$0xff]
  %v30 = vld [vmem:[%s1 + $0x38] sm:$0xff]
  %v31 = vld [vmem:[%s2] sm:$0xf]
  %v33 = vlaneseq
  %v34 = vshrl.u32 %v33, 7
  %v35 = vsub.s32 0, %v34
  %v36 = vrot.slane %v31, %v35
  %v37 = vlaneseq
  %v38 = vshrl.u32 %v37, 7
  %v39 = vsub.s32 1, %v38
  %v40 = vrot.slane %v31, %v39
  %v41 = vlaneseq
  %v42 = vshrl.u32 %v41, 7
  %v43 = vsub.s32 2, %v42
  %v44 = vrot.slane %v31, %v43
  %v45 = vlaneseq
  %v46 = vshrl.u32 %v45, 7
  %v47 = vsub.s32 3, %v46
  %v48 = vrot.slane %v31, %v47
  %v61 = vunpack.c.l.b16 %v23
  %v62 = vunpack.c.h.b16 %v23
  %v63 = vunpack.c.l.b16 %v24
  %v64 = vunpack.c.h.b16 %v24
  %v65 = vunpack.c.l.b16 %v25
  %v66 = vunpack.c.h.b16 %v25
  %v67 = vunpack.c.l.b16 %v26
  %v68 = vunpack.c.h.b16 %v26
  %v69 = vunpack.c.l.b16 %v27
  %v70 = vunpack.c.h.b16 %v27
  %v71 = vunpack.c.l.b16 %v28
  %v72 = vunpack.c.h.b16 %v28
  %v73 = vunpack.c.l.b16 %v29
  %v74 = vunpack.c.h.b16 %v29
  %v75 = vunpack.c.l.b16 %v30
  %v76 = vunpack.c.h.b16 %v30
  %v77 = vpack.c.b16 %v65, %v61
  %v78 = vpack.c.b16 %v66, %v62
  %v79 = vpack.c.b16 %v67, %v63
  %v80 = vpack.c.b16 %v68, %v64
  %v81 = vpack.c.b16 %v73, %v69
  %v82 = vpack.c.b16 %v74, %v70
  %v83 = vpack.c.b16 %v75, %v71
  %v84 = vpack.c.b16 %v76, %v72
  %vm93 = vcmask 261120
  %v95 = vsel %vm93, %v22, 0
  %97 = vmatprep.subr.bf16.mxu0 0
  %98 = vmatpush1.bf16.msra.mxu0 0
  %99 = vmatprep.subr.bf16.mxu0 0
  %100 = vmatpush1.bf16.msra.mxu0 0
  %101 = vmatprep.subr.bf16.mxu0 0
  %102 = vmatpush1.bf16.msra.mxu0 0
  %103 = vmatprep.subr.bf16.mxu0 0
  %104 = vmatpush1.bf16.msra.mxu0 0
  %105 = vmatprep.subr.bf16.mxu0 0
  %106 = vmatpush1.bf16.msra.mxu0 0
  %107 = vmatprep.subr.bf16.mxu0 0
  %108 = vmatpush1.bf16.msra.mxu0 0
  %109 = vmatprep.subr.bf16.mxu0 %v82
  %110 = vmatpush1.bf16.msra.mxu0 %v81
  %111 = vmatprep.subr.bf16.mxu0 %v78
  %112 = vmatpush1.bf16.msra.mxu0 %v77
  %113 = vmatprep.subr.bf16.mxu0 0
  %114 = vmatpush2.bf16.msra.mxu0 0
  %115 = vmatprep.subr.bf16.mxu0 0
  %116 = vmatpush2.bf16.msra.mxu0 0
  %117 = vmatprep.subr.bf16.mxu0 0
  %118 = vmatpush2.bf16.msra.mxu0 0
  %119 = vmatprep.subr.bf16.mxu0 0
  %120 = vmatpush2.bf16.msra.mxu0 0
  %121 = vmatprep.subr.bf16.mxu0 0
  %122 = vmatpush2.bf16.msra.mxu0 0
  %123 = vmatprep.subr.bf16.mxu0 0
  %124 = vmatpush2.bf16.msra.mxu0 0
  %125 = vmatprep.subr.bf16.mxu0 0
  %126 = vmatpush2.bf16.msra.mxu0 0
  %127 = vmatprep.subr.bf16.mxu0 0
  %128 = vmatpush2.bf16.msra.mxu0 0
  %129 = vmatprep.mubr.bf16.mxu0 0
  %130 = vmatmul.mubr.bf16.gmra.mxu0 %v95
  %v131 = vpop.f32.mrf.mxu0
  %v132 = vadd.f32 %v36, %v131
  %v133 = vpop.f32.mrf.mxu0
  %v134 = vadd.f32 %v40, %v133
  %v135 = vpop.f32.mrf.mxu0
  %v136 = vpop.f32.mrf.mxu0
  %137 = vdwg.mxu0
  %138 = vmatprep.subr.bf16.mxu0 0
  %139 = vmatpush1.bf16.msra.mxu0 0
  %140 = vmatprep.subr.bf16.mxu0 0
  %141 = vmatpush1.bf16.msra.mxu0 0
  %142 = vmatprep.subr.bf16.mxu0 0
  %143 = vmatpush1.bf16.msra.mxu0 0
  %144 = vmatprep.subr.bf16.mxu0 0
  %145 = vmatpush1.bf16.msra.mxu0 0
  %146 = vmatprep.subr.bf16.mxu0 0
  %147 = vmatpush1.bf16.msra.mxu0 0
  %148 = vmatprep.subr.bf16.mxu0 0
  %149 = vmatpush1.bf16.msra.mxu0 0
  %150 = vmatprep.subr.bf16.mxu0 %v84
  %151 = vmatpush1.bf16.msra.mxu0 %v83
  %152 = vmatprep.subr.bf16.mxu0 %v80
  %153 = vmatpush1.bf16.msra.mxu0 %v79
  %154 = vmatprep.subr.bf16.mxu0 0
  %155 = vmatpush2.bf16.msra.mxu0 0
  %156 = vmatprep.subr.bf16.mxu0 0
  %157 = vmatpush2.bf16.msra.mxu0 0
  %158 = vmatprep.subr.bf16.mxu0 0
  %159 = vmatpush2.bf16.msra.mxu0 0
  %160 = vmatprep.subr.bf16.mxu0 0
  %161 = vmatpush2.bf16.msra.mxu0 0
  %162 = vmatprep.subr.bf16.mxu0 0
  %163 = vmatpush2.bf16.msra.mxu0 0
  %164 = vmatprep.subr.bf16.mxu0 0
  %165 = vmatpush2.bf16.msra.mxu0 0
  %166 = vmatprep.subr.bf16.mxu0 0
  %167 = vmatpush2.bf16.msra.mxu0 0
  %168 = vmatprep.subr.bf16.mxu0 0
  %169 = vmatpush2.bf16.msra.mxu0 0
  %170 = vmatprep.mubr.bf16.mxu0 0
  %171 = vmatmul.mubr.bf16.gmra.mxu0 %v95
  %v172 = vpop.f32.mrf.mxu0
  %v173 = vadd.f32 %v44, %v172
  %v174 = vpop.f32.mrf.mxu0
  %v175 = vadd.f32 %v48, %v174
  %v176 = vpop.f32.mrf.mxu0
  %v177 = vpop.f32.mrf.mxu0
  %178 = vdwg.mxu0
  %v179 = vmax.f32 %v132, 0.0
  %v180 = vmax.f32 %v134, 0.0
  %v181 = vmax.f32 %v173, 0.0
  %v182 = vmax.f32 %v175, 0.0
  %v183 = vpack.c.bf16 %v179, %v179
  %v184 = vpack.c.bf16 %v180, %v180
  %v185 = vpack.c.bf16 %v181, %v181
  %v186 = vpack.c.bf16 %v182, %v182
  %v187 = vld [vmem:[%s3] sm:$0xf]
  %v188 = vld [vmem:[%s3 + $0x4] sm:$0xf]
  %v189 = vld [vmem:[%s3 + $0x8] sm:$0xf]
  %v190 = vld [vmem:[%s3 + $0xc] sm:$0xf]
  %v191 = vld [vmem:[%s3 + $0x10] sm:$0xf]
  %v192 = vld [vmem:[%s3 + $0x14] sm:$0xf]
  %v193 = vld [vmem:[%s3 + $0x18] sm:$0xf]
  %v194 = vld [vmem:[%s3 + $0x1c] sm:$0xf]
  %v195 = vld [vmem:[%s3 + $0x20] sm:$0xf]
  %v196 = vld [vmem:[%s3 + $0x24] sm:$0xf]
  %v197 = vld [vmem:[%s3 + $0x28] sm:$0xf]
  %v198 = vld [vmem:[%s3 + $0x2c] sm:$0xf]
  %v199 = vld [vmem:[%s3 + $0x30] sm:$0xf]
  %v200 = vld [vmem:[%s3 + $0x34] sm:$0xf]
  %v201 = vld [vmem:[%s3 + $0x38] sm:$0xf]
  %v202 = vld [vmem:[%s3 + $0x3c] sm:$0xf]
  %v203 = vld [vmem:[%s3 + $0x40] sm:$0xf]
  %v204 = vld [vmem:[%s3 + $0x44] sm:$0xf]
  %v205 = vld [vmem:[%s3 + $0x48] sm:$0xf]
  %v206 = vld [vmem:[%s3 + $0x4c] sm:$0xf]
  %v207 = vld [vmem:[%s3 + $0x50] sm:$0xf]
  %v208 = vld [vmem:[%s3 + $0x54] sm:$0xf]
  %v209 = vld [vmem:[%s3 + $0x58] sm:$0xf]
  %v210 = vld [vmem:[%s3 + $0x5c] sm:$0xf]
  %v211 = vld [vmem:[%s3 + $0x60] sm:$0xf]
  %v212 = vld [vmem:[%s3 + $0x64] sm:$0xf]
  %v213 = vld [vmem:[%s3 + $0x68] sm:$0xf]
  %v214 = vld [vmem:[%s3 + $0x6c] sm:$0xf]
  %v215 = vld [vmem:[%s3 + $0x70] sm:$0xf]
  %v216 = vld [vmem:[%s3 + $0x74] sm:$0xf]
  %v217 = vld [vmem:[%s3 + $0x78] sm:$0xf]
  %v218 = vld [vmem:[%s3 + $0x7c] sm:$0xf]
  %v219 = vld [vmem:[%s3 + $0x80] sm:$0xf]
  %v220 = vld [vmem:[%s3 + $0x84] sm:$0xf]
  %v221 = vld [vmem:[%s3 + $0x88] sm:$0xf]
  %v222 = vld [vmem:[%s3 + $0x8c] sm:$0xf]
  %v223 = vld [vmem:[%s3 + $0x90] sm:$0xf]
  %v224 = vld [vmem:[%s3 + $0x94] sm:$0xf]
  %v225 = vld [vmem:[%s3 + $0x98] sm:$0xf]
  %v226 = vld [vmem:[%s3 + $0x9c] sm:$0xf]
  %v227 = vld [vmem:[%s3 + $0xa0] sm:$0xf]
  %v228 = vld [vmem:[%s3 + $0xa4] sm:$0xf]
  %v229 = vld [vmem:[%s3 + $0xa8] sm:$0xf]
  %v230 = vld [vmem:[%s3 + $0xac] sm:$0xf]
  %v231 = vld [vmem:[%s3 + $0xb0] sm:$0xf]
  %v232 = vld [vmem:[%s3 + $0xb4] sm:$0xf]
  %v233 = vld [vmem:[%s3 + $0xb8] sm:$0xf]
  %v234 = vld [vmem:[%s3 + $0xbc] sm:$0xf]
  %v235 = vld [vmem:[%s3 + $0xc0] sm:$0xf]
  %v236 = vld [vmem:[%s3 + $0xc4] sm:$0xf]
  %v237 = vld [vmem:[%s3 + $0xc8] sm:$0xf]
  %v238 = vld [vmem:[%s3 + $0xcc] sm:$0xf]
  %v239 = vld [vmem:[%s3 + $0xd0] sm:$0xf]
  %v240 = vld [vmem:[%s3 + $0xd4] sm:$0xf]
  %v241 = vld [vmem:[%s3 + $0xd8] sm:$0xf]
  %v242 = vld [vmem:[%s3 + $0xdc] sm:$0xf]
  %v243 = vld [vmem:[%s3 + $0xe0] sm:$0xf]
  %v244 = vld [vmem:[%s3 + $0xe4] sm:$0xf]
  %v245 = vld [vmem:[%s3 + $0xe8] sm:$0xf]
  %v246 = vld [vmem:[%s3 + $0xec] sm:$0xf]
  %v247 = vld [vmem:[%s3 + $0xf0] sm:$0xf]
  %v248 = vld [vmem:[%s3 + $0xf4] sm:$0xf]
  %v249 = vld [vmem:[%s3 + $0xf8] sm:$0xf]
  %v250 = vld [vmem:[%s3 + $0xfc] sm:$0xf]
  %v251 = vld [vmem:[%s4] sm:$0x1]
  %v253 = vlaneseq
  %v254 = vshrl.u32 %v253, 7
  %v255 = vsub.s32 0, %v254
  %v256 = vrot.slane %v251, %v255
  %v322 = vunpack.c.l.b16 %v187
  %v323 = vunpack.c.l.b16 %v188
  %v324 = vunpack.c.l.b16 %v189
  %v325 = vunpack.c.l.b16 %v190
  %v326 = vunpack.c.l.b16 %v191
  %v327 = vunpack.c.l.b16 %v192
  %v328 = vunpack.c.l.b16 %v193
  %v329 = vunpack.c.l.b16 %v194
  %v330 = vunpack.c.l.b16 %v195
  %v331 = vunpack.c.l.b16 %v196
  %v332 = vunpack.c.l.b16 %v197
  %v333 = vunpack.c.l.b16 %v198
  %v334 = vunpack.c.l.b16 %v199
  %v335 = vunpack.c.l.b16 %v200
  %v336 = vunpack.c.l.b16 %v201
  %v337 = vunpack.c.l.b16 %v202
  %v338 = vunpack.c.l.b16 %v203
  %v339 = vunpack.c.l.b16 %v204
  %v340 = vunpack.c.l.b16 %v205
  %v341 = vunpack.c.l.b16 %v206
  %v342 = vunpack.c.l.b16 %v207
  %v343 = vunpack.c.l.b16 %v208
  %v344 = vunpack.c.l.b16 %v209
  %v345 = vunpack.c.l.b16 %v210
  %v346 = vunpack.c.l.b16 %v211
  %v347 = vunpack.c.l.b16 %v212
  %v348 = vunpack.c.l.b16 %v213
  %v349 = vunpack.c.l.b16 %v214
  %v350 = vunpack.c.l.b16 %v215
  %v351 = vunpack.c.l.b16 %v216
  %v352 = vunpack.c.l.b16 %v217
  %v353 = vunpack.c.l.b16 %v218
  %v354 = vunpack.c.l.b16 %v219
  %v355 = vunpack.c.l.b16 %v220
  %v356 = vunpack.c.l.b16 %v221
  %v357 = vunpack.c.l.b16 %v222
  %v358 = vunpack.c.l.b16 %v223
  %v359 = vunpack.c.l.b16 %v224
  %v360 = vunpack.c.l.b16 %v225
  %v361 = vunpack.c.l.b16 %v226
  %v362 = vunpack.c.l.b16 %v227
  %v363 = vunpack.c.l.b16 %v228
  %v364 = vunpack.c.l.b16 %v229
  %v365 = vunpack.c.l.b16 %v230
  %v366 = vunpack.c.l.b16 %v231
  %v367 = vunpack.c.l.b16 %v232
  %v368 = vunpack.c.l.b16 %v233
  %v369 = vunpack.c.l.b16 %v234
  %v370 = vunpack.c.l.b16 %v235
  %v371 = vunpack.c.l.b16 %v236
  %v372 = vunpack.c.l.b16 %v237
  %v373 = vunpack.c.l.b16 %v238
  %v374 = vunpack.c.l.b16 %v239
  %v375 = vunpack.c.l.b16 %v240
  %v376 = vunpack.c.l.b16 %v241
  %v377 = vunpack.c.l.b16 %v242
  %v378 = vunpack.c.l.b16 %v243
  %v379 = vunpack.c.l.b16 %v244
  %v380 = vunpack.c.l.b16 %v245
  %v381 = vunpack.c.l.b16 %v246
  %v382 = vunpack.c.l.b16 %v247
  %v383 = vunpack.c.l.b16 %v248
  %v384 = vunpack.c.l.b16 %v249
  %v385 = vunpack.c.l.b16 %v250
  %v386 = vpack.c.b16 %v323, %v322
  %v387 = vpack.c.b16 %v325, %v324
  %v388 = vpack.c.b16 %v327, %v326
  %v389 = vpack.c.b16 %v329, %v328
  %v390 = vpack.c.b16 %v331, %v330
  %v391 = vpack.c.b16 %v333, %v332
  %v392 = vpack.c.b16 %v335, %v334
  %v393 = vpack.c.b16 %v337, %v336
  %v394 = vpack.c.b16 %v339, %v338
  %v395 = vpack.c.b16 %v341, %v340
  %v396 = vpack.c.b16 %v343, %v342
  %v397 = vpack.c.b16 %v345, %v344
  %v398 = vpack.c.b16 %v347, %v346
  %v399 = vpack.c.b16 %v349, %v348
  %v400 = vpack.c.b16 %v351, %v350
  %v401 = vpack.c.b16 %v353, %v352
  %v402 = vpack.c.b16 %v355, %v354
  %v403 = vpack.c.b16 %v357, %v356
  %v404 = vpack.c.b16 %v359, %v358
  %v405 = vpack.c.b16 %v361, %v360
  %v406 = vpack.c.b16 %v363, %v362
  %v407 = vpack.c.b16 %v365, %v364
  %v408 = vpack.c.b16 %v367, %v366
  %v409 = vpack.c.b16 %v369, %v368
  %v410 = vpack.c.b16 %v371, %v370
  %v411 = vpack.c.b16 %v373, %v372
  %v412 = vpack.c.b16 %v375, %v374
  %v413 = vpack.c.b16 %v377, %v376
  %v414 = vpack.c.b16 %v379, %v378
  %v415 = vpack.c.b16 %v381, %v380
  %v416 = vpack.c.b16 %v383, %v382
  %v417 = vpack.c.b16 %v385, %v384
  %450 = vmatprep.subr.bf16.mxu0 0
  %451 = vmatpush1.bf16.msra.mxu0 %v393
  %452 = vmatprep.subr.bf16.mxu0 0
  %453 = vmatpush1.bf16.msra.mxu0 %v392
  %454 = vmatprep.subr.bf16.mxu0 0
  %455 = vmatpush1.bf16.msra.mxu0 %v391
  %456 = vmatprep.subr.bf16.mxu0 0
  %457 = vmatpush1.bf16.msra.mxu0 %v390
  %458 = vmatprep.subr.bf16.mxu0 0
  %459 = vmatpush1.bf16.msra.mxu0 %v389
  %460 = vmatprep.subr.bf16.mxu0 0
  %461 = vmatpush1.bf16.msra.mxu0 %v388
  %462 = vmatprep.subr.bf16.mxu0 0
  %463 = vmatpush1.bf16.msra.mxu0 %v387
  %464 = vmatprep.subr.bf16.mxu0 0
  %465 = vmatpush1.bf16.msra.mxu0 %v386
  %466 = vmatprep.subr.bf16.mxu0 0
  %467 = vmatpush2.bf16.msra.mxu0 %v401
  %468 = vmatprep.subr.bf16.mxu0 0
  %469 = vmatpush2.bf16.msra.mxu0 %v400
  %470 = vmatprep.subr.bf16.mxu0 0
  %471 = vmatpush2.bf16.msra.mxu0 %v399
  %472 = vmatprep.subr.bf16.mxu0 0
  %473 = vmatpush2.bf16.msra.mxu0 %v398
  %474 = vmatprep.subr.bf16.mxu0 0
  %475 = vmatpush2.bf16.msra.mxu0 %v397
  %476 = vmatprep.subr.bf16.mxu0 0
  %477 = vmatpush2.bf16.msra.mxu0 %v396
  %478 = vmatprep.subr.bf16.mxu0 0
  %479 = vmatpush2.bf16.msra.mxu0 %v395
  %480 = vmatprep.subr.bf16.mxu0 0
  %481 = vmatpush2.bf16.msra.mxu0 %v394
  %482 = vmatprep.mubr.bf16.mxu0 %v184
  %483 = vmatmul.mubr.bf16.gmra.mxu0 %v183
  %v484 = vpop.f32.mrf.mxu0
  %v485 = vadd.f32 %v256, %v484
  %v486 = vpop.f32.mrf.mxu0
  %v487 = vpop.f32.mrf.mxu0
  %v488 = vpop.f32.mrf.mxu0
  %489 = vdwg.mxu0
  %490 = vmatprep.subr.bf16.mxu0 0
  %491 = vmatpush1.bf16.msra.mxu0 %v409
  %492 = vmatprep.subr.bf16.mxu0 0
  %493 = vmatpush1.bf16.msra.mxu0 %v408
  %494 = vmatprep.subr.bf16.mxu0 0
  %495 = vmatpush1.bf16.msra.mxu0 %v407
  %496 = vmatprep.subr.bf16.mxu0 0
  %497 = vmatpush1.bf16.msra.mxu0 %v406
  %498 = vmatprep.subr.bf16.mxu0 0
  %499 = vmatpush1.bf16.msra.mxu0 %v405
  %500 = vmatprep.subr.bf16.mxu0 0
  %501 = vmatpush1.bf16.msra.mxu0 %v404
  %502 = vmatprep.subr.bf16.mxu0 0
  %503 = vmatpush1.bf16.msra.mxu0 %v403
  %504 = vmatprep.subr.bf16.mxu0 0
  %505 = vmatpush1.bf16.msra.mxu0 %v402
  %506 = vmatprep.subr.bf16.mxu0 0
  %507 = vmatpush2.bf16.msra.mxu0 %v417
  %508 = vmatprep.subr.bf16.mxu0 0
  %509 = vmatpush2.bf16.msra.mxu0 %v416
  %510 = vmatprep.subr.bf16.mxu0 0
  %511 = vmatpush2.bf16.msra.mxu0 %v415
  %512 = vmatprep.subr.bf16.mxu0 0
  %513 = vmatpush2.bf16.msra.mxu0 %v414
  %514 = vmatprep.subr.bf16.mxu0 0
  %515 = vmatpush2.bf16.msra.mxu0 %v413
  %516 = vmatprep.subr.bf16.mxu0 0
  %517 = vmatpush2.bf16.msra.mxu0 %v412
  %518 = vmatprep.subr.bf16.mxu0 0
  %519 = vmatpush2.bf16.msra.mxu0 %v411
  %520 = vmatprep.subr.bf16.mxu0 0
  %521 = vmatpush2.bf16.msra.mxu0 %v410
  %522 = vmatprep.mubr.bf16.mxu0 %v186
  %523 = vmatmul.mubr.bf16.gmra.mxu0 %v185
  %v524 = vpop.f32.mrf.mxu0
  %v525 = vadd.f32 %v485, %v524
  %v526 = vpop.f32.mrf.mxu0
  %v527 = vpop.f32.mrf.mxu0
  %v528 = vpop.f32.mrf.mxu0
  %529 = vdwg.mxu0
  %vm530 = vcmask 15360
  %531 = vst.msk [vmem:[%s5] sm:$0xff] %vm530, %v525
  // Predicated region
  $region22: #{tpu_custom_call.1} parent=0 // pred_check
    _
  $region23: #{tpu_custom_call.1} parent=0 // pred_check_branch
    %533 = sbr.rel (0) target = $region25
  $region24: #{tpu_custom_call.1} parent=0 // pred_region
    _
  $region25: #{tpu_custom_call.1} parent=0 // pred_fallthru
    _
  // Predicated region
  $region26: #{tpu_custom_call.1} parent=0 // pred_check
    _
  $region27: #{tpu_custom_call.1} parent=0 // pred_check_branch
    %535 = sbr.rel (0) target = $region29
  $region28: #{tpu_custom_call.1} parent=0 // pred_region
    _
  $region29: #{tpu_custom_call.1} parent=0 // pred_fallthru
    _

</llo_original>
